<compile_context>
chip_gen: v7x
topology: tpu7x:2x2x1
jax: 0.10.0
libtpu: 0.0.40
codegen_flags: <defaults>
</compile_context>

<pallas_src>
import functools

import jax
import jax.numpy as jnp
from jax import lax
from jax.experimental import pallas as pl
from jax.experimental.pallas import tpu as pltpu

K = 15               # Conv1d kernel size
PAD = 7              # Conv1d padding (same-length output)
HALO = 8             # zero halo rows above the valid rows (>= PAD, multiple of 8)
LANE = 128           # TPU lane width
C_IN_G = 250         # conv1 in-channels per group (2 groups -> 500 total)
C_IN_G_PAD = 256     # conv1 in-channels per group, padded to a lane multiple
C1G = 80             # conv1 out-channels per group (160 total)
C2 = 64              # conv2 out-channels
C3 = 64              # conv3 out-channels
HID = 16             # head hidden width
NUM_CLASSES = 11


def _round_up(n, m):
    return (n + m - 1) // m * m


def _pad_len(n):
    """Padded row count: 8 zero halo rows on top, >=8 below, multiple of 8."""
    return _round_up(n + 2 * HALO, 8)


# -----------------------------------------------------------------------------
# pltpu.roll direction probe (runs one trivial kernel the first time, cached).
# -----------------------------------------------------------------------------
def _roll_probe_kernel(x_ref, o_ref):
    o_ref[...] = pltpu.roll(x_ref[...], 1, 0)


@functools.cache
def _roll_is_forward() -> bool:
    """True iff pltpu.roll follows np.roll semantics (out[i] = in[i - shift])."""
    with jax.ensure_compile_time_eval():
        x = jnp.arange(8 * 128, dtype=jnp.float32).reshape(8, 128)
        y = pl.pallas_call(
            _roll_probe_kernel,
            out_shape=jax.ShapeDtypeStruct((8, 128), jnp.float32),
        )(x)
        fwd = bool(jnp.all(y[1] == x[0]))
        bwd = bool(jnp.all(y[0] == x[1]))
    if fwd == bwd:
        raise RuntimeError("could not determine pltpu.roll rotation direction")
    return fwd


def _roll_amount(shift, n, forward):
    """Convert an np.roll-style shift to the static amount for pltpu.roll."""
    return shift % n if forward else (-shift) % n


# -----------------------------------------------------------------------------
# In-kernel building blocks (pure value -> value functions).
# -----------------------------------------------------------------------------
def _conv15(x_bf, w_wide, forward):
    """Conv1d(k=15, pad=7) = one wide matmul + per-tap roll-accumulate.

    x_bf:   (n_rows, k_in) bf16; rows [HALO, HALO+L) hold data, halo rows zero.
    w_wide: (k_in, 15*128) bf16; cols [t*128, t*128+Cout) hold tap t, rest zero.
    Returns (n_rows, 128) f32; rows [HALO, HALO+L) hold the conv output (no
    bias).  Halo rows hold finite don't-care values (masked by the decimation
    matmul, never read otherwise).
    """
    n_rows = x_bf.shape[0]
    y = jnp.dot(x_bf, w_wide, preferred_element_type=jnp.float32)
    acc = None
    for t in range(K):
        blk = y[:, t * LANE:(t + 1) * LANE]                 # lane-aligned block
        amt = _roll_amount(PAD - t, n_rows, forward)
        z = blk if amt == 0 else pltpu.roll(blk, amt, 0)    # XLU sublane rotate
        acc = z if acc is None else acc + z
    return acc


def _relu_maxpool5(acc, bias, forward):
    """relu(maxpool1d(acc, 5, 5) + bias), evaluated at every row.

    Only rows HALO + 5*q are meaningful; the decimation matmul that follows
    selects exactly those and zeroes everything else.  Equals torch's
    maxpool(relu(conv + bias)) because the per-channel bias add and relu are
    monotone (so they commute with the window max).
    """
    n_rows = acc.shape[0]
    m = acc
    for j in range(1, 5):
        m = jnp.maximum(m, pltpu.roll(acc, _roll_amount(-j, n_rows, forward), 0))
    return jnp.maximum(m + bias, 0.0)


def _disc_head_kernel(x_ref, w1a_ref, w1b_ref, b1_ref, w2_ref, b2_ref,
                      w3_ref, b3_ref, sel1_ref, sel2_ref, sel3_ref,
                      wo1_ref, bo1_ref, wo2_ref, bo2_ref, out_ref, *, forward):
    # ---- conv1 (groups=2): two independent wide matmuls ----------------------
    acc1a = _conv15(x_ref[0, 0], w1a_ref[...], forward)       # (l_pad, 128)
    acc1b = _conv15(x_ref[0, 1], w1b_ref[...], forward)       # (l_pad, 128)
    acc1 = jnp.concatenate([acc1a, acc1b], axis=1)            # (l_pad, 256)
    a1 = _relu_maxpool5(acc1, b1_ref[...], forward).astype(jnp.bfloat16)
    # decimate by 5 + rebuild zero halos (exact: one 1.0 per selected row)
    x2 = jnp.dot(sel1_ref[...], a1,
                 preferred_element_type=jnp.float32).astype(jnp.bfloat16)

    # ---- conv2: group outputs merged into a single K=256 matmul --------------
    acc2 = _conv15(x2, w2_ref[...], forward)                  # (l1_pad, 128)
    a2 = _relu_maxpool5(acc2, b2_ref[...], forward).astype(jnp.bfloat16)
    x3 = jnp.dot(sel2_ref[...], a2,
                 preferred_element_type=jnp.float32).astype(jnp.bfloat16)

    # ---- conv3 ----------------------------------------------------------------
    acc3 = _conv15(x3, w3_ref[...], forward)                  # (l2_pad, 128)
    a3 = _relu_maxpool5(acc3, b3_ref[...], forward)           # keep f32
    p3 = jnp.dot(sel3_ref[...], a3, preferred_element_type=jnp.float32)  # (L3, 128)

    # ---- head: Linear(64,16) -> ReLU -> Linear(16,1) per pooled timestep -----
    z = jnp.maximum(
        jnp.dot(p3, wo1_ref[...], preferred_element_type=jnp.float32) + bo1_ref[...],
        0.0)
    out_ref[0] = (jnp.dot(z, wo2_ref[...], preferred_element_type=jnp.float32)
                  + bo2_ref[...])


# -----------------------------------------------------------------------------
# Host-side wrapper.
# -----------------------------------------------------------------------------
def discriminator_head(stacked, params):
    """stacked: (B, 2, L, 250) bf16 -- the two conv1 groups stacked."""
    B, G, L, c = stacked.shape
    assert G == 2 and c == C_IN_G and L % 125 == 0
    L1, L2, L3 = L // 5, L // 25, L // 125
    l_pad, l1_pad, l2_pad = _pad_len(L), _pad_len(L1), _pad_len(L2)
    assert params["sel1"].shape == (l1_pad, l_pad), "params built for another seq len"

    # zero halo rows + channel pad 250->256, one fused bf16 pad op
    x = jnp.pad(stacked.astype(jnp.bfloat16),
                ((0, 0), (0, 0), (HALO, l_pad - L - HALO), (0, C_IN_G_PAD - C_IN_G)))

    kernel = functools.partial(_disc_head_kernel, forward=_roll_is_forward())

    grid_spec = pltpu.PrefetchScalarGridSpec(
        num_scalar_prefetch=0,
        grid=(B,),
        in_specs=[
            pl.BlockSpec((1, 2, l_pad, C_IN_G_PAD), lambda b: (b, 0, 0, 0)),  # x
            pl.BlockSpec((C_IN_G_PAD, K * LANE), lambda b: (0, 0)),           # w1a
            pl.BlockSpec((C_IN_G_PAD, K * LANE), lambda b: (0, 0)),           # w1b
            pl.BlockSpec((1, 2 * LANE), lambda b: (0, 0)),                    # b1
            pl.BlockSpec((2 * LANE, K * LANE), lambda b: (0, 0)),             # w2
            pl.BlockSpec((1, LANE), lambda b: (0, 0)),                        # b2
            pl.BlockSpec((LANE, K * LANE), lambda b: (0, 0)),                 # w3
            pl.BlockSpec((1, LANE), lambda b: (0, 0)),                        # b3
            pl.BlockSpec((l1_pad, l_pad), lambda b: (0, 0)),                  # sel1
            pl.BlockSpec((l2_pad, l1_pad), lambda b: (0, 0)),                 # sel2
            pl.BlockSpec((L3, l2_pad), lambda b: (0, 0)),                     # sel3
            pl.BlockSpec((LANE, HID), lambda b: (0, 0)),                      # wo1
            pl.BlockSpec((1, HID), lambda b: (0, 0)),                         # bo1
            pl.BlockSpec((HID, 1), lambda b: (0, 0)),                         # wo2
            pl.BlockSpec((1, 1), lambda b: (0, 0)),                           # bo2
        ],
        out_specs=pl.BlockSpec((1, L3, 1), lambda b: (b, 0, 0)),
    )

    return pl.pallas_call(
        kernel,
        out_shape=jax.ShapeDtypeStruct((B, L3, 1), jnp.float32),
        grid_spec=grid_spec,
        compiler_params=pltpu.CompilerParams(
            dimension_semantics=("parallel",),     # batch elements are independent
            vmem_limit_bytes=32 * 1024 * 1024,
        ),
    )(x, params["w1a"], params["w1b"], params["b1"],
      params["w2"], params["b2"], params["w3"], params["b3"],
      params["sel1"], params["sel2"], params["sel3"],
      params["wo1"], params["bo1"], params["wo2"], params["bo2"])


# -----------------------------------------------------------------------------
# Parameter construction (host-side packing: wide taps, lane padding, sels).
# -----------------------------------------------------------------------------
def _wide_tap_weight(w_taps, cin_pad):
    """(Cout, Cin, K) torch-layout conv weight -> (cin_pad, K*128) bf16.

    Column block [t*128, t*128 + Cout) holds tap t so one wide matmul produces
    all 15 per-tap outputs in adjacent 128-lane blocks; padded rows/cols zero.
    """
    cout, cin, k = w_taps.shape
    assert k == K and cout <= LANE and cin <= cin_pad
    w = jnp.transpose(w_taps, (2, 1, 0))                             # (K, Cin, Cout)
    w = jnp.pad(w, ((0, 0), (0, cin_pad - cin), (0, LANE - cout)))   # (K, cin_pad, 128)
    return jnp.transpose(w, (1, 0, 2)).reshape(cin_pad, K * LANE).astype(jnp.bfloat16)


def _pool_sel(n_out, halo_out, n_valid, n_src, dtype):
    """0/1 decimation matrix: output row halo_out+q selects source row HALO+5q.

    Rows outside [halo_out, halo_out + n_valid) are all-zero, so the matmul
    also rebuilds the zero halo rows the next conv layer relies on.
    """
    r = jnp.arange(n_out)[:, None]
    c = jnp.arange(n_src)[None, :]
    valid = (r >= halo_out) & (r < halo_out + n_valid)
    hit = c == HALO + 5 * (r - halo_out)
    return (valid & hit).astype(dtype)


def init_raw_params(key):
    """Parameters in the PyTorch layout (Conv1d: (Cout, Cin, K); Linear: (out, in))."""
    ks = jax.random.split(key, 12)

    def n(k, shape, scale):
        return scale * jax.random.normal(k, shape, jnp.float32)

    return dict(
        w1=n(ks[0], (2 * C1G, C_IN_G, K), 0.02), b1=n(ks[1], (2 * C1G,), 0.02),
        w2=n(ks[2], (C2, 2 * C1G, K), 0.02),     b2=n(ks[3], (C2,), 0.02),
        w3=n(ks[4], (C3, C2, K), 0.02),          b3=n(ks[5], (C3,), 0.02),
        wo1=n(ks[6], (HID, C3), 0.05),           bo1=n(ks[7], (HID,), 0.05),
        wo2=n(ks[8], (1, HID), 0.1),             bo2=n(ks[9], (1,), 0.1),
        # stand-ins for the two AMCNet_shallow feature extractors
        w_freeze=n(ks[10], (2 + NUM_CLASSES, C_IN_G), 0.2),
        w_unfreeze=n(ks[11], (2 + NUM_CLASSES, C_IN_G), 0.2),
    )


def pack_params(raw, seq_len):
    L = seq_len
    assert L % 125 == 0 and L > 0
    L1, L2, L3 = L // 5, L // 25, L // 125
    l_pad, l1_pad, l2_pad = _pad_len(L), _pad_len(L1), _pad_len(L2)

    # conv1 (groups=2): one wide weight per group.
    w1a = _wide_tap_weight(raw["w1"][:C1G], C_IN_G_PAD)              # (256, 1920)
    w1b = _wide_tap_weight(raw["w1"][C1G:], C_IN_G_PAD)
    b1 = jnp.zeros((1, 2 * LANE), jnp.float32)
    b1 = b1.at[0, :C1G].set(raw["b1"][:C1G])
    b1 = b1.at[0, LANE:LANE + C1G].set(raw["b1"][C1G:])

    # conv2: in-channels re-laid to [80 grp-a | 48 zero | 80 grp-b | 48 zero]
    # to match the kernel's conv1 output layout; fused into one K=256 matmul.
    w2_relaid = jnp.zeros((C2, 2 * LANE, K), jnp.float32)
    w2_relaid = w2_relaid.at[:, :C1G, :].set(raw["w2"][:, :C1G, :])
    w2_relaid = w2_relaid.at[:, LANE:LANE + C1G, :].set(raw["w2"][:, C1G:, :])
    w2 = _wide_tap_weight(w2_relaid, 2 * LANE)                       # (256, 1920)
    b2 = jnp.zeros((1, LANE), jnp.float32).at[0, :C2].set(raw["b2"])

    # conv3
    w3 = _wide_tap_weight(raw["w3"], LANE)                           # (128, 1920)
    b3 = jnp.zeros((1, LANE), jnp.float32).at[0, :C3].set(raw["b3"])

    # pooling decimation matrices (bf16 where the result feeds a bf16 conv,
    # f32 for the last one so the head input stays exact).
    sel1 = _pool_sel(l1_pad, HALO, L1, l_pad, jnp.bfloat16)
    sel2 = _pool_sel(l2_pad, HALO, L2, l1_pad, jnp.bfloat16)
    sel3 = _pool_sel(L3, 0, L3, l2_pad, jnp.float32)

    # head (Linear(64,16) -> ReLU -> Linear(16,1)); wo1 rows zero-padded to 128.
    wo1 = jnp.zeros((LANE, HID), jnp.float32).at[:C3].set(raw["wo1"].T)
    bo1 = raw["bo1"].reshape(1, HID)
    wo2 = raw["wo2"].T.astype(jnp.float32)                           # (16, 1)
    bo2 = raw["bo2"].reshape(1, 1)

    return dict(w1a=w1a, w1b=w1b, b1=b1, w2=w2, b2=b2, w3=w3, b3=b3,
                sel1=sel1, sel2=sel2, sel3=sel3,
                wo1=wo1, bo1=bo1, wo2=wo2, bo2=bo2,
                w_freeze=raw["w_freeze"], w_unfreeze=raw["w_unfreeze"])


# -----------------------------------------------------------------------------
# Full module forward.
# -----------------------------------------------------------------------------
# TODO(synk): AMCNet_shallow's definition is not provided with the module; this
# deterministic stand-in maps (x, y) to a (B, L, 250) feature ("L3_feature") in
# plain JAX (emitting bf16 directly) so the Pallas hot path gets correctly
# shaped inputs.
def amcnet_shallow_stub(x, y, w_proj):
    B, _, L = x.shape
    feats = jnp.concatenate(
        [jnp.transpose(x, (0, 2, 1)),
         jnp.broadcast_to(y[:, None, :], (B, L, y.shape[-1]))], axis=-1)
    return jnp.tanh(feats @ w_proj).astype(jnp.bfloat16)            # (B, L, 250)


def double_amc_discriminator(x, y, params):
    l3_feature = amcnet_shallow_stub(x, y, params["w_freeze"])      # ACM_Freeze
    dr_feature = amcnet_shallow_stub(x, y, params["w_unfreeze"])    # ACM_unFreeze
    # torch: cat([L3, Dr], dim=2) -> channels 0..249 = L3 (conv1 group 0),
    # 250..499 = Dr (group 1).  The kernel takes the two groups stacked so the
    # grouped-conv operands stay lane aligned; cat_feature keeps the original
    # (B, L, 500) layout (== torch's returned cat_feature.transpose(1, 2)).
    stacked = jnp.stack([l3_feature, dr_feature], axis=1)           # (B, 2, L, 250)
    cat_feature = jnp.concatenate([l3_feature, dr_feature], axis=2)  # (B, L, 500)
    real_fake = discriminator_head(stacked, params)                 # (B, L/125, 1)
    return real_fake, cat_feature


# -----------------------------------------------------------------------------
# Pure-JAX reference (mirrors the kernel's bf16 operand / f32 accumulate math).
# -----------------------------------------------------------------------------
def _reference_head(stacked, raw):
    f32 = jnp.float32
    xg = stacked.astype(f32)                                        # bf16 values

    def bf(w):
        return w.astype(jnp.bfloat16).astype(f32)

    def conv15(h, w, b):                                            # h: (B, T, Cin)
        T = h.shape[1]
        hp = jnp.pad(h, ((0, 0), (PAD, PAD), (0, 0)))
        y = jnp.zeros(h.shape[:2] + (w.shape[0],), f32)
        for k in range(K):
            y = y + jnp.einsum("btc,oc->bto", hp[:, k:k + T], bf(w[:, :, k]),
                               precision=lax.Precision.HIGHEST)
        return y + b[None, None, :]

    def relu_pool(y):
        b_, t_, c_ = y.shape
        r = jnp.maximum(y, 0.0)
        return r.reshape(b_, t_ // 5, 5, c_).max(axis=2)

    h1a = relu_pool(conv15(xg[:, 0], raw["w1"][:C1G], raw["b1"][:C1G]))
    h1b = relu_pool(conv15(xg[:, 1], raw["w1"][C1G:], raw["b1"][C1G:]))
    p1 = jnp.concatenate([h1a, h1b], axis=-1).astype(jnp.bfloat16).astype(f32)
    p2 = relu_pool(conv15(p1, raw["w2"], raw["b2"])).astype(jnp.bfloat16).astype(f32)
    p3 = relu_pool(conv15(p2, raw["w3"], raw["b3"]))
    z = jnp.maximum(jnp.einsum("bto,oh->bth", p3, raw["wo1"].T,
                               precision=lax.Precision.HIGHEST) + raw["bo1"], 0.0)
    return jnp.einsum("bth,ho->bto", z, raw["wo2"].T,
                      precision=lax.Precision.HIGHEST) + raw["bo2"]


if __name__ == "__main__":
    B, L = 2, 250
    key = jax.random.PRNGKey(0)
    kx, ky, kp = jax.random.split(key, 3)
    x = jax.random.normal(kx, (B, 2, L), jnp.float32)                # IQ signal
    y = jax.nn.one_hot(jax.random.randint(ky, (B,), 0, NUM_CLASSES),
                       NUM_CLASSES, dtype=jnp.float32)               # class cond.

    raw = init_raw_params(kp)
    params = pack_params(raw, L)

    _roll_is_forward()   # probe + cache the TPU roll convention (outside jit)

    fwd = jax.jit(double_amc_discriminator)
    real_fake, cat_feature = fwd(x, y, params)
    jax.block_until_ready((real_fake, cat_feature))

    assert real_fake.shape == (B, L // 125, 1)
    assert cat_feature.shape == (B, L, 2 * C_IN_G)
    assert bool(jnp.all(jnp.isfinite(real_fake)))

    # Verify against a pure-JAX reference on the exact features the kernel saw.
    stacked = jnp.stack([cat_feature[..., :C_IN_G], cat_feature[..., C_IN_G:]],
                        axis=1)
    ref = jax.jit(_reference_head)(stacked, raw)
    jax.block_until_ready(ref)
    assert bool(jnp.allclose(real_fake, ref, rtol=2e-2, atol=2e-3)), (
        "kernel/reference mismatch", real_fake, ref)

    print("KERNEL_OK")
</pallas_src>

<mosaic_0001>
module attributes {stable_mosaic.version = 11 : i64} {
  func.func @_roll_probe_kernel(%arg0: memref<8x128xf32, #tpu.memory_space<vmem>>, %arg1: memref<8x128xf32, #tpu.memory_space<vmem>>) attributes {dimension_semantics = [], scalar_prefetch = 0 : i64, scratch_operands = 0 : i64, tpu.core_type = #tpu.core_type<tc>} {
    %c0 = arith.constant 0 : index
    %c0_0 = arith.constant 0 : index
    %0 = vector.load %arg0[%c0, %c0_0] : memref<8x128xf32, #tpu.memory_space<vmem>>, vector<8x128xf32>
    %c1_i32 = arith.constant 1 : i32
    %1 = tpu.dynamic_rotate %0 by %c1_i32 dim 0 : vector<8x128xf32>, i32 -> vector<8x128xf32>
    %c0_1 = arith.constant 0 : index
    %c0_2 = arith.constant 0 : index
    %2 = vector.load %arg1[%c0_1, %c0_2] : memref<8x128xf32, #tpu.memory_space<vmem>>, vector<8x128xf32>
    tpu.vector_store %arg1[%c0_1, %c0_2], %1 {strides = array<i32>} : memref<8x128xf32, #tpu.memory_space<vmem>>, vector<8x128xf32>,
    return
  }
}

</mosaic_0001>

<llo_original>
// kernel: tpu_custom_call.1
$region0: #{tpu_custom_call.1}
  #allocation0 [shape = 'u32[]', space=smem, size = 0x4, offset = 0x4, fixed_abs, tag = 'smem constant byte address 0x4 - core index']
  #allocation1 [shape = 'u32[144,128]{1,0:T(1,128)}', space=vmem, size = 0x12000, scoped, tag = 'internal scratch']
  %s0 = inlined_call_operand.hbm [shape: f32[8,128], index: 0, kind: input, shape index: {}]
  %s1 = inlined_call_operand.hbm [shape: f32[8,128], index: 1, kind: output, shape index: {}]
  %s2 = sld [smem:[#allocation0]]
  $region18: #{tpu_custom_call.1} parent=0
    _
  %s4 = ssub.s32 1, %s2
  %s5 = scalar_select 0, %s4, %s2
  $region1: #{tpu_custom_call.1} parent=0
    #allocation2 [shape = 'u8[4096]{0}', space=vmem, size = 0x1000, scoped, tag = 'input window, operand 0, single buffered']
    #allocation3 [shape = 's32[1]{0}', space=sflag, size = 0x4, scoped, tag = 'scoped memory for tpu_custom_call.1']
    #allocation4 [shape = 's32[1]{0}', space=sflag, size = 0x4, scoped, tag = 'scoped memory for tpu_custom_call.1']
    #allocation5 [shape = 'u8[4096]{0}', space=vmem, size = 0x1000, scoped, tag = 'output window, operand 0, single buffered']
    %6 = vsyncpa [#allocation3], 0
    %7 = vsyncpa [#allocation4], 0
    // Predicated region
    $region2: #{tpu_custom_call.1} parent=1 // pred_check
      _
    $region3: #{tpu_custom_call.1} parent=1 // pred_check_branch
      %9 = sbr.rel (0) target = $region5
    $region4: #{tpu_custom_call.1} parent=1 // pred_region
      %s11 = ssub.s32 128, 128
      %12 = vsyncadd [#allocation3], %s11
      %s14 = sshll.u32 [#allocation2], 4
      %s15 = int_to_ptr.vmem [resolvable:$true] %s14
      %17 = dma.hbm_to_vmem [thread:$0]  %s0, 128, %s15, [#allocation3]
    $region5: #{tpu_custom_call.1} parent=1 // pred_fallthru
      _
    // Predicated region
    $region6: #{tpu_custom_call.1} parent=1 // pred_check
      _
    $region7: #{tpu_custom_call.1} parent=1 // pred_check_branch
      %19 = sbr.rel (0) target = $region9
    $region8: #{tpu_custom_call.1} parent=1 // pred_region
      %20 = dma.done [#allocation3], 128
    $region9: #{tpu_custom_call.1} parent=1 // pred_fallthru
      _
    %v21 = vld [vmem:[#allocation2] sm:$0xff]
    %v22 = vrot.slane %v21, 7
    %23 = vst [vmem:[#allocation5] sm:$0xff] %v22
    // Predicated region
    $region10: #{tpu_custom_call.1} parent=1 // pred_check
      _
    $region11: #{tpu_custom_call.1} parent=1 // pred_check_branch
      %25 = sbr.rel (0) target = $region13
    $region12: #{tpu_custom_call.1} parent=1 // pred_region
      %s27 = ssub.s32 128, 128
      %28 = vsyncadd [#allocation4], %s27
      %s30 = sshll.u32 [#allocation5], 4
      %s31 = int_to_ptr.vmem [resolvable:$true] %s30
      %33 = dma.vmem_to_hbm [thread:$0]  %s31, 128, %s1, [#allocation4]
    $region13: #{tpu_custom_call.1} parent=1 // pred_fallthru
      _
    // Predicated region
    $region14: #{tpu_custom_call.1} parent=1 // pred_check
      _
    $region15: #{tpu_custom_call.1} parent=1 // pred_check_branch
      %35 = sbr.rel (0) target = $region17
    $region16: #{tpu_custom_call.1} parent=1 // pred_region
      %36 = dma.done [#allocation4], 128
    $region17: #{tpu_custom_call.1} parent=1 // pred_fallthru
      _
    %37 = vsyncpa [#allocation3], 1
    %38 = vsyncpa [#allocation4], 1

</llo_original>
